<compile_context>
chip_gen: v6e
topology: v6e:2x2x1
jax: 0.10.0
libtpu: 0.0.40
codegen_flags: <defaults>
</compile_context>

<pallas_src>
import functools

import jax
import jax.numpy as jnp
from jax.experimental import pallas as pl
from jax.experimental.pallas import tpu as pltpu

EPS = 1e-5  # nn.BatchNorm2d default eps


# ----------------------------------------------------------------------------
# Fused kernel
# ----------------------------------------------------------------------------
def _bn_relu(y, g, b):
    # y: (C, P); BatchNorm2d(track_running_stats=False) -> batch stats (biased
    # variance) per channel over all N*H*W elements (the P/lane axis).
    mean = jnp.mean(y, axis=1, keepdims=True)
    ctr = y - mean
    var = jnp.mean(ctr * ctr, axis=1, keepdims=True)
    return jnp.maximum(ctr * jax.lax.rsqrt(var + EPS) * g + b, 0.0)


def _make_fused_kernel(*, mode, K, H, W, P, n_prev):
    """mode in {"conv", "sepconv", "max", "avg"}."""

    def kernel(*refs):
        it = iter(refs)
        x_ref = next(it)
        w1_ref, g1_ref, b1_ref = next(it), next(it), next(it)
        wd_ref = next(it) if mode == "sepconv" else None
        if mode in ("conv", "sepconv"):
            w2_ref, g2_ref, b2_ref = next(it), next(it), next(it)
        prev_refs = [next(it) for _ in range(n_prev)]
        o_ref = next(it)

        # (h, w) coordinates of every flattened lane position p = n*H*W + h*W + w
        p_idx = jax.lax.broadcasted_iota(jnp.int32, (1, P), 1)
        w_idx = p_idx % W
        h_idx = (p_idx // W) % H

        def shift(v, dy, dx, pad_val):
            # out[p] = v[p + dy*W + dx] where (h+dy, w+dx) is inside the image,
            # else pad_val.  Lane rotation on the XLU + VPU select.
            s = dy * W + dx
            rolled = v if s == 0 else pltpu.roll(v, shift=(-s) % P, axis=1)
            conds = []
            if dy < 0:
                conds.append(h_idx >= -dy)
            if dy > 0:
                conds.append(h_idx < H - dy)
            if dx < 0:
                conds.append(w_idx >= -dx)
            if dx > 0:
                conds.append(w_idx < W - dx)
            if not conds:
                return rolled
            valid = conds[0]
            for c in conds[1:]:
                valid = valid & c
            return jnp.where(valid, rolled, pad_val)

        # ---- stage 1: 1x1 conv (transposed -> lane-dense output) + BN + ReLU
        y = jnp.dot(w1_ref[...], x_ref[...], preferred_element_type=jnp.float32)
        y = _bn_relu(y, g1_ref[...], b1_ref[...])

        # ---- stage 2
        if mode == "sepconv":
            pad = (K - 1) // 2
            wd = wd_ref[...]  # (C, K*K)
            acc = jnp.zeros_like(y)
            for dy in range(-pad, pad + 1):
                for dx in range(-pad, pad + 1):
                    tap = (dy + pad) * K + (dx + pad)
                    acc = acc + shift(y, dy, dx, 0.0) * wd[:, tap:tap + 1]
            y = acc

        if mode in ("conv", "sepconv"):
            y = jnp.dot(w2_ref[...], y, preferred_element_type=jnp.float32)
            y = _bn_relu(y, g2_ref[...], b2_ref[...])
        elif mode == "max":
            neg = jnp.float32(-jnp.inf)
            th = jnp.maximum(jnp.maximum(y, shift(y, -1, 0, neg)), shift(y, 1, 0, neg))
            y = jnp.maximum(jnp.maximum(th, shift(th, 0, -1, neg)), shift(th, 0, 1, neg))
        elif mode == "avg":
            # AvgPool2d(kernel=3, stride=1, padding=1), count_include_pad=True.
            th = y + shift(y, -1, 0, 0.0) + shift(y, 1, 0, 0.0)
            y = (th + shift(th, 0, -1, 0.0) + shift(th, 0, 1, 0.0)) * (1.0 / 9.0)

        # ---- skip connections (unrolled adds, no stacking)
        for pr in prev_refs:
            y = y + pr[...]

        o_ref[...] = y

    return kernel


# ----------------------------------------------------------------------------
# Fused wrapper: one pallas_call for the whole layer forward
# ----------------------------------------------------------------------------
@functools.partial(jax.jit, static_argnames=("mode", "kernel_size"))
def _fused_branch_nchw(x_nchw, params, prevs_nchw, *, mode, kernel_size):
    N, Cin, H, W = x_nchw.shape
    P = N * H * W
    Cout = params["w1"].shape[0]

    # Layout plumbing: channels -> sublanes, flattened N*H*W -> lanes (lane-dense).
    x_cp = jnp.transpose(x_nchw, (1, 0, 2, 3)).reshape(Cin, P)
    prevs_cp = [jnp.transpose(p, (1, 0, 2, 3)).reshape(Cout, P) for p in prevs_nchw]

    inputs = [x_cp, params["w1"], params["g1"], params["b1"]]
    if mode == "sepconv":
        inputs.append(params["wd"])
    if mode in ("conv", "sepconv"):
        inputs += [params["w2"], params["g2"], params["b2"]]
    inputs += prevs_cp

    kernel = _make_fused_kernel(
        mode=mode, K=kernel_size, H=H, W=W, P=P, n_prev=len(prevs_cp)
    )

    out_cp = pl.pallas_call(
        kernel,
        out_shape=jax.ShapeDtypeStruct((Cout, P), jnp.float32),
        grid=(1,),
        in_specs=[pl.BlockSpec(a.shape, lambda i: (0, 0)) for a in inputs],
        out_specs=pl.BlockSpec((Cout, P), lambda i: (0, 0)),
        compiler_params=pltpu.CompilerParams(dimension_semantics=("arbitrary",)),
    )(*inputs)

    return jnp.transpose(out_cp.reshape(Cout, N, H, W), (1, 0, 2, 3))


# ----------------------------------------------------------------------------
# Module equivalents (parameter containers + forward glue)
# ----------------------------------------------------------------------------
def _init_w(key, shape, fan_in):
    return jax.random.normal(key, shape, jnp.float32) * (2.0 / fan_in) ** 0.5


class ConvBranch:
    def __init__(self, in_filters, out_filters, kernel, separable, key):
        self.mode = "sepconv" if separable else "conv"
        self.kernel = kernel
        if separable:
            # As in the PyTorch module, the depthwise conv is parameterized with
            # in_filters but applied to the out_filters-channel conv1 output.
            assert in_filters == out_filters, "separable branch needs in == out"
        k = jax.random.split(key, 3)
        self.params = {
            "w1": _init_w(k[0], (out_filters, in_filters), in_filters),  # (Cout, Cin)
            "g1": jnp.ones((out_filters, 1), jnp.float32),
            "b1": jnp.zeros((out_filters, 1), jnp.float32),
            "w2": _init_w(k[2], (out_filters, in_filters), in_filters),
            "g2": jnp.ones((out_filters, 1), jnp.float32),
            "b2": jnp.zeros((out_filters, 1), jnp.float32),
        }
        if separable:
            self.params["wd"] = _init_w(
                k[1], (in_filters, kernel * kernel), kernel * kernel
            )


class PoolBranch:
    def __init__(self, in_filters, out_filters, kernel, pool_type, key):
        self.mode = pool_type  # "max" | "avg"
        self.kernel = kernel
        self.params = {
            "w1": _init_w(key, (out_filters, in_filters), in_filters),
            "g1": jnp.ones((out_filters, 1), jnp.float32),
            "b1": jnp.zeros((out_filters, 1), jnp.float32),
        }


class FixedEnasLayer:
    def __init__(self, in_filters, out_filters, layer_id, prev_layers, branch_id, key):
        self.layer_id = layer_id
        self.layer_type = branch_id
        if branch_id == 0:
            self.layer = ConvBranch(in_filters, out_filters, 3, False, key)
        elif branch_id == 1:
            self.layer = ConvBranch(in_filters, out_filters, 5, False, key)
        elif branch_id == 2:
            self.layer = ConvBranch(in_filters, out_filters, 3, True, key)
        elif branch_id == 3:
            self.layer = ConvBranch(in_filters, out_filters, 5, True, key)
        elif branch_id == 4:
            self.layer = PoolBranch(in_filters, out_filters, 3, "max", key)
        elif branch_id == 5:
            self.layer = PoolBranch(in_filters, out_filters, 3, "avg", key)
        else:
            raise AssertionError("branch_id must be in [0,6) but was:", branch_id)

    def forward(self, x_nchw, config, prev_outputs_nchw):
        branch_id = config[0]
        skip_connections = config[1] if self.layer_id > 0 else []
        assert branch_id in range(0, 6)
        assert len(skip_connections) == len(prev_outputs_nchw)
        selected = tuple(
            prev_outputs_nchw[i]
            for i in range(len(prev_outputs_nchw))
            if skip_connections[i] == 1
        )
        return _fused_branch_nchw(
            x_nchw, self.layer.params, selected,
            mode=self.layer.mode, kernel_size=self.layer.kernel,
        )


# ----------------------------------------------------------------------------
# Pure-JAX reference (NCHW, independent of the kernel's roll/mask machinery)
# ----------------------------------------------------------------------------
def _ref_conv1x1_bn_relu(x, w, g, b):
    y = jnp.einsum("oc,nchw->nohw", w, x, precision=jax.lax.Precision.HIGHEST)
    mean = jnp.mean(y, axis=(0, 2, 3), keepdims=True)
    var = jnp.mean((y - mean) ** 2, axis=(0, 2, 3), keepdims=True)
    y = (y - mean) * jax.lax.rsqrt(var + EPS)
    y = y * g.reshape(1, -1, 1, 1) + b.reshape(1, -1, 1, 1)
    return jnp.maximum(y, 0.0)


def _ref_depthwise(x, wd, K):
    pad = (K - 1) // 2
    N, C, H, W = x.shape
    xp = jnp.pad(x, ((0, 0), (0, 0), (pad, pad), (pad, pad)))
    out = jnp.zeros_like(x)
    for dy in range(K):
        for dx in range(K):
            out = out + xp[:, :, dy:dy + H, dx:dx + W] * wd[:, dy * K + dx].reshape(1, C, 1, 1)
    return out


def _ref_pool(x, pool_type):
    N, C, H, W = x.shape
    if pool_type == "max":
        xp = jnp.pad(x, ((0, 0), (0, 0), (1, 1), (1, 1)), constant_values=-jnp.inf)
        out = jnp.full_like(x, -jnp.inf)
        for dy in range(3):
            for dx in range(3):
                out = jnp.maximum(out, xp[:, :, dy:dy + H, dx:dx + W])
        return out
    xp = jnp.pad(x, ((0, 0), (0, 0), (1, 1), (1, 1)))
    out = jnp.zeros_like(x)
    for dy in range(3):
        for dx in range(3):
            out = out + xp[:, :, dy:dy + H, dx:dx + W]
    return out / 9.0


def _ref_forward(layer, x, config, prevs):
    p, mode, K = layer.layer.params, layer.layer.mode, layer.layer.kernel
    out = _ref_conv1x1_bn_relu(x, p["w1"], p["g1"], p["b1"])
    if mode == "sepconv":
        out = _ref_depthwise(out, p["wd"], K)
    if mode in ("conv", "sepconv"):
        out = _ref_conv1x1_bn_relu(out, p["w2"], p["g2"], p["b2"])
    elif mode == "max":
        out = _ref_pool(out, "max")
    elif mode == "avg":
        out = _ref_pool(out, "avg")
    skip = config[1]
    for i in range(len(prevs)):
        if skip[i] == 1:
            out = out + prevs[i]
    return out


# ----------------------------------------------------------------------------
if __name__ == "__main__":
    key = jax.random.PRNGKey(0)
    kx, kp, k0, k3, k4, k5 = jax.random.split(key, 6)

    # ENAS fixed layers require in_filters == out_filters for conv2 shapes.
    N, C, H, W = 2, 8, 16, 16
    x = jax.random.normal(kx, (N, C, H, W), jnp.float32)
    prev = jax.random.normal(kp, (N, C, H, W), jnp.float32)

    cases = [
        (0, (0, [0])),  # plain conv branch, no active skip
        (3, (3, [1])),  # separable 5x5 branch, one skip connection
        (4, (4, [1])),  # max pool branch, one skip connection
        (5, (5, [0])),  # avg pool branch, no active skip
    ]
    keys = {0: k0, 3: k3, 4: k4, 5: k5}

    for branch_id, config in cases:
        layer = FixedEnasLayer(C, C, layer_id=1, prev_layers=None,
                               branch_id=branch_id, key=keys[branch_id])
        out = layer.forward(x, config, [prev])
        jax.block_until_ready(out)
        assert out.shape == (N, C, H, W)
        ref = _ref_forward(layer, x, config, [prev])
        assert bool(jnp.allclose(out, ref, atol=5e-3, rtol=5e-3)), (
            f"mismatch for branch {branch_id}"
        )

    print("KERNEL_OK")
</pallas_src>

<mosaic_0001>
module attributes {stable_mosaic.version = 11 : i64} {
  func.func @kernel(%arg0: i32, %arg1: memref<8x512xf32, #tpu.memory_space<vmem>>, %arg2: memref<8x8xf32, #tpu.memory_space<vmem>>, %arg3: memref<8x1xf32, #tpu.memory_space<vmem>>, %arg4: memref<8x1xf32, #tpu.memory_space<vmem>>, %arg5: memref<8x8xf32, #tpu.memory_space<vmem>>, %arg6: memref<8x1xf32, #tpu.memory_space<vmem>>, %arg7: memref<8x1xf32, #tpu.memory_space<vmem>>, %arg8: memref<8x512xf32, #tpu.memory_space<vmem>>) attributes {dimension_semantics = [#tpu.dimension_semantics<arbitrary>], iteration_bounds = array<i64: 1>, scalar_prefetch = 0 : i64, scratch_operands = 0 : i64, tpu.core_type = #tpu.core_type<tc>, window_params = [{pipeline_mode = #tpu.pipeline_mode<synchronous>, transform_indices = @transform_0, window_bounds = array<i64: 8, 512>}, {pipeline_mode = #tpu.pipeline_mode<synchronous>, transform_indices = @transform_1, window_bounds = array<i64: 8, 8>}, {pipeline_mode = #tpu.pipeline_mode<synchronous>, transform_indices = @transform_2, window_bounds = array<i64: 8, 1>}, {pipeline_mode = #tpu.pipeline_mode<synchronous>, transform_indices = @transform_3, window_bounds = array<i64: 8, 1>}, {pipeline_mode = #tpu.pipeline_mode<synchronous>, transform_indices = @transform_4, window_bounds = array<i64: 8, 8>}, {pipeline_mode = #tpu.pipeline_mode<synchronous>, transform_indices = @transform_5, window_bounds = array<i64: 8, 1>}, {pipeline_mode = #tpu.pipeline_mode<synchronous>, transform_indices = @transform_6, window_bounds = array<i64: 8, 1>}, {pipeline_mode = #tpu.pipeline_mode<synchronous>, transform_indices = @transform_7, window_bounds = array<i64: 8, 512>}]} {
    %c0 = arith.constant 0 : index
    %c0_0 = arith.constant 0 : index
    %0 = vector.load %arg2[%c0, %c0_0] : memref<8x8xf32, #tpu.memory_space<vmem>>, vector<8x8xf32>
    %c0_1 = arith.constant 0 : index
    %c0_2 = arith.constant 0 : index
    %1 = vector.load %arg1[%c0_1, %c0_2] : memref<8x512xf32, #tpu.memory_space<vmem>>, vector<8x512xf32>
    %cst = arith.constant dense<0.000000e+00> : vector<8x512xf32>
    %2 = tpu.matmul %0, %1, %cst {dimension_numbers = #tpu.dot_dimension_numbers<[1], [0], [0], [1], [0, 0, 1, 1], [], []>} : vector<8x8xf32>, vector<8x512xf32>, vector<8x512xf32> -> vector<8x512xf32>
    %c0_3 = arith.constant 0 : index
    %c0_4 = arith.constant 0 : index
    %3 = vector.load %arg3[%c0_3, %c0_4] : memref<8x1xf32, #tpu.memory_space<vmem>>, vector<8x1xf32>
    %c0_5 = arith.constant 0 : index
    %c0_6 = arith.constant 0 : index
    %4 = vector.load %arg4[%c0_5, %c0_6] : memref<8x1xf32, #tpu.memory_space<vmem>>, vector<8x1xf32>
    %cst_7 = arith.constant dense<0.000000e+00> : vector<8xf32>
    %5 = vector.multi_reduction <add>, %2, %cst_7 [1] : vector<8x512xf32> to vector<8xf32>
    %6 = vector.shape_cast %5 : vector<8xf32> to vector<8x1xf32>
    %cst_8 = arith.constant 5.120000e+02 : f32
    %7 = vector.broadcast %cst_8 : f32 to vector<8x1xf32>
    %8 = arith.divf %6, %7 : vector<8x1xf32>
    %9 = vector.broadcast %8 : vector<8x1xf32> to vector<8x512xf32>
    %10 = arith.subf %2, %9 : vector<8x512xf32>
    %11 = arith.mulf %10, %10 : vector<8x512xf32>
    %cst_9 = arith.constant dense<0.000000e+00> : vector<8xf32>
    %12 = vector.multi_reduction <add>, %11, %cst_9 [1] : vector<8x512xf32> to vector<8xf32>
    %13 = vector.shape_cast %12 : vector<8xf32> to vector<8x1xf32>
    %cst_10 = arith.constant 5.120000e+02 : f32
    %14 = vector.broadcast %cst_10 : f32 to vector<8x1xf32>
    %15 = arith.divf %13, %14 : vector<8x1xf32>
    %cst_11 = arith.constant 9.99999974E-6 : f32
    %16 = vector.broadcast %cst_11 : f32 to vector<8x1xf32>
    %17 = arith.addf %15, %16 : vector<8x1xf32>
    %18 = math.rsqrt %17 : vector<8x1xf32>
    %19 = vector.broadcast %18 : vector<8x1xf32> to vector<8x512xf32>
    %20 = arith.mulf %10, %19 : vector<8x512xf32>
    %21 = vector.broadcast %3 : vector<8x1xf32> to vector<8x512xf32>
    %22 = arith.mulf %20, %21 : vector<8x512xf32>
    %23 = vector.broadcast %4 : vector<8x1xf32> to vector<8x512xf32>
    %24 = arith.addf %22, %23 : vector<8x512xf32>
    %cst_12 = arith.constant 0.000000e+00 : f32
    %25 = vector.broadcast %cst_12 : f32 to vector<8x512xf32>
    %26 = arith.maximumf %24, %25 : vector<8x512xf32>
    %c0_13 = arith.constant 0 : index
    %c0_14 = arith.constant 0 : index
    %27 = vector.load %arg5[%c0_13, %c0_14] : memref<8x8xf32, #tpu.memory_space<vmem>>, vector<8x8xf32>
    %cst_15 = arith.constant dense<0.000000e+00> : vector<8x512xf32>
    %28 = tpu.matmul %27, %26, %cst_15 {dimension_numbers = #tpu.dot_dimension_numbers<[1], [0], [0], [1], [0, 0, 1, 1], [], []>} : vector<8x8xf32>, vector<8x512xf32>, vector<8x512xf32> -> vector<8x512xf32>
    %c0_16 = arith.constant 0 : index
    %c0_17 = arith.constant 0 : index
    %29 = vector.load %arg6[%c0_16, %c0_17] : memref<8x1xf32, #tpu.memory_space<vmem>>, vector<8x1xf32>
    %c0_18 = arith.constant 0 : index
    %c0_19 = arith.constant 0 : index
    %30 = vector.load %arg7[%c0_18, %c0_19] : memref<8x1xf32, #tpu.memory_space<vmem>>, vector<8x1xf32>
    %cst_20 = arith.constant dense<0.000000e+00> : vector<8xf32>
    %31 = vector.multi_reduction <add>, %28, %cst_20 [1] : vector<8x512xf32> to vector<8xf32>
    %32 = vector.shape_cast %31 : vector<8xf32> to vector<8x1xf32>
    %cst_21 = arith.constant 5.120000e+02 : f32
    %33 = vector.broadcast %cst_21 : f32 to vector<8x1xf32>
    %34 = arith.divf %32, %33 : vector<8x1xf32>
    %35 = vector.broadcast %34 : vector<8x1xf32> to vector<8x512xf32>
    %36 = arith.subf %28, %35 : vector<8x512xf32>
    %37 = arith.mulf %36, %36 : vector<8x512xf32>
    %cst_22 = arith.constant dense<0.000000e+00> : vector<8xf32>
    %38 = vector.multi_reduction <add>, %37, %cst_22 [1] : vector<8x512xf32> to vector<8xf32>
    %39 = vector.shape_cast %38 : vector<8xf32> to vector<8x1xf32>
    %cst_23 = arith.constant 5.120000e+02 : f32
    %40 = vector.broadcast %cst_23 : f32 to vector<8x1xf32>
    %41 = arith.divf %39, %40 : vector<8x1xf32>
    %cst_24 = arith.constant 9.99999974E-6 : f32
    %42 = vector.broadcast %cst_24 : f32 to vector<8x1xf32>
    %43 = arith.addf %41, %42 : vector<8x1xf32>
    %44 = math.rsqrt %43 : vector<8x1xf32>
    %45 = vector.broadcast %44 : vector<8x1xf32> to vector<8x512xf32>
    %46 = arith.mulf %36, %45 : vector<8x512xf32>
    %47 = vector.broadcast %29 : vector<8x1xf32> to vector<8x512xf32>
    %48 = arith.mulf %46, %47 : vector<8x512xf32>
    %49 = vector.broadcast %30 : vector<8x1xf32> to vector<8x512xf32>
    %50 = arith.addf %48, %49 : vector<8x512xf32>
    %cst_25 = arith.constant 0.000000e+00 : f32
    %51 = vector.broadcast %cst_25 : f32 to vector<8x512xf32>
    %52 = arith.maximumf %50, %51 : vector<8x512xf32>
    %c0_26 = arith.constant 0 : index
    %c0_27 = arith.constant 0 : index
    %53 = vector.load %arg8[%c0_26, %c0_27] : memref<8x512xf32, #tpu.memory_space<vmem>>, vector<8x512xf32>
    tpu.vector_store %arg8[%c0_26, %c0_27], %52 {strides = array<i32>} : memref<8x512xf32, #tpu.memory_space<vmem>>, vector<8x512xf32>,
    return
  }
  func.func @transform_0(%arg0: i32) -> (i32, i32) {
    %c0_i32 = arith.constant 0 : i32
    %c0_i32_0 = arith.constant 0 : i32
    %c0_i32_1 = arith.constant 0 : i32
    return %c0_i32, %c0_i32_0 : i32, i32
  }
  func.func @transform_1(%arg0: i32) -> (i32, i32) {
    %c0_i32 = arith.constant 0 : i32
    %c0_i32_0 = arith.constant 0 : i32
    %c0_i32_1 = arith.constant 0 : i32
    return %c0_i32, %c0_i32_0 : i32, i32
  }
  func.func @transform_2(%arg0: i32) -> (i32, i32) {
    %c0_i32 = arith.constant 0 : i32
    %c0_i32_0 = arith.constant 0 : i32
    %c0_i32_1 = arith.constant 0 : i32
    return %c0_i32, %c0_i32_0 : i32, i32
  }
  func.func @transform_3(%arg0: i32) -> (i32, i32) {
    %c0_i32 = arith.constant 0 : i32
    %c0_i32_0 = arith.constant 0 : i32
    %c0_i32_1 = arith.constant 0 : i32
    return %c0_i32, %c0_i32_0 : i32, i32
  }
  func.func @transform_4(%arg0: i32) -> (i32, i32) {
    %c0_i32 = arith.constant 0 : i32
    %c0_i32_0 = arith.constant 0 : i32
    %c0_i32_1 = arith.constant 0 : i32
    return %c0_i32, %c0_i32_0 : i32, i32
  }
  func.func @transform_5(%arg0: i32) -> (i32, i32) {
    %c0_i32 = arith.constant 0 : i32
    %c0_i32_0 = arith.constant 0 : i32
    %c0_i32_1 = arith.constant 0 : i32
    return %c0_i32, %c0_i32_0 : i32, i32
  }
  func.func @transform_6(%arg0: i32) -> (i32, i32) {
    %c0_i32 = arith.constant 0 : i32
    %c0_i32_0 = arith.constant 0 : i32
    %c0_i32_1 = arith.constant 0 : i32
    return %c0_i32, %c0_i32_0 : i32, i32
  }
  func.func @transform_7(%arg0: i32) -> (i32, i32) {
    %c0_i32 = arith.constant 0 : i32
    %c0_i32_0 = arith.constant 0 : i32
    %c0_i32_1 = arith.constant 0 : i32
    return %c0_i32, %c0_i32_0 : i32, i32
  }
}

</mosaic_0001>

<llo_original>
// kernel: _fused_branch_nchw.1
$region0: #{_fused_branch_nchw.1}
  #allocation0 [shape = 'u32[]', space=smem, size = 0x4, offset = 0x4, fixed_abs, tag = 'smem constant byte address 0x4 - core index']
  #allocation1 [shape = 'u32[144,128]{1,0:T(1,128)}', space=vmem, size = 0x12000, scoped, tag = 'internal scratch']
  %s0 = inlined_call_operand.vmem [shape: f32[8,512], index: 0, kind: input, shape index: {}]
  %s1 = inlined_call_operand.vmem [shape: f32[8,8], index: 1, kind: input, shape index: {}]
  %s2 = inlined_call_operand.vmem [shape: f32[8,1], index: 2, kind: input, shape index: {}]
  %s3 = inlined_call_operand.vmem [shape: f32[8,1], index: 3, kind: input, shape index: {}]
  %s4 = inlined_call_operand.vmem [shape: f32[8,8], index: 4, kind: input, shape index: {}]
  %s5 = inlined_call_operand.vmem [shape: f32[8,1], index: 5, kind: input, shape index: {}]
  %s6 = inlined_call_operand.vmem [shape: f32[8,1], index: 6, kind: input, shape index: {}]
  %s7 = inlined_call_operand.vmem [shape: f32[8,512], index: 7, kind: output, shape index: {}]
  %s8 = sld [smem:[#allocation0]]
  $region38: #{_fused_branch_nchw.1} parent=0
    _
  %s10 = ssub.s32 1, %s8
  %s11 = scalar_select 0, %s10, %s8
  // Predicated region
  $region2: #{_fused_branch_nchw.1} parent=0 // pred_check
    _
  $region3: #{_fused_branch_nchw.1} parent=0 // pred_check_branch
    %13 = sbr.rel (0) target = $region5
  $region4: #{_fused_branch_nchw.1} parent=0 // pred_region
    _
  $region5: #{_fused_branch_nchw.1} parent=0 // pred_fallthru
    _
  // Predicated region
  $region6: #{_fused_branch_nchw.1} parent=0 // pred_check
    _
  $region7: #{_fused_branch_nchw.1} parent=0 // pred_check_branch
    %15 = sbr.rel (0) target = $region9
  $region8: #{_fused_branch_nchw.1} parent=0 // pred_region
    _
  $region9: #{_fused_branch_nchw.1} parent=0 // pred_fallthru
    _
  // Predicated region
  $region10: #{_fused_branch_nchw.1} parent=0 // pred_check
    _
  $region11: #{_fused_branch_nchw.1} parent=0 // pred_check_branch
    %17 = sbr.rel (0) target = $region13
  $region12: #{_fused_branch_nchw.1} parent=0 // pred_region
    _
  $region13: #{_fused_branch_nchw.1} parent=0 // pred_fallthru
    _
  // Predicated region
  $region14: #{_fused_branch_nchw.1} parent=0 // pred_check
    _
  $region15: #{_fused_branch_nchw.1} parent=0 // pred_check_branch
    %19 = sbr.rel (0) target = $region17
  $region16: #{_fused_branch_nchw.1} parent=0 // pred_region
    _
  $region17: #{_fused_branch_nchw.1} parent=0 // pred_fallthru
    _
  // Predicated region
  $region18: #{_fused_branch_nchw.1} parent=0 // pred_check
    _
  $region19: #{_fused_branch_nchw.1} parent=0 // pred_check_branch
    %21 = sbr.rel (0) target = $region21
  $region20: #{_fused_branch_nchw.1} parent=0 // pred_region
    _
  $region21: #{_fused_branch_nchw.1} parent=0 // pred_fallthru
    _
  // Predicated region
  $region22: #{_fused_branch_nchw.1} parent=0 // pred_check
    _
  $region23: #{_fused_branch_nchw.1} parent=0 // pred_check_branch
    %23 = sbr.rel (0) target = $region25
  $region24: #{_fused_branch_nchw.1} parent=0 // pred_region
    _
  $region25: #{_fused_branch_nchw.1} parent=0 // pred_fallthru
    _
  // Predicated region
  $region26: #{_fused_branch_nchw.1} parent=0 // pred_check
    _
  $region27: #{_fused_branch_nchw.1} parent=0 // pred_check_branch
    %25 = sbr.rel (0) target = $region29
  $region28: #{_fused_branch_nchw.1} parent=0 // pred_region
    _
  $region29: #{_fused_branch_nchw.1} parent=0 // pred_fallthru
    _
  %v26 = vld [vmem:[%s1] sm:$0xff]
  %v27 = vld [vmem:[%s0] sm:$0xff]
  %v28 = vld [vmem:[%s0 + $0x8] sm:$0xff]
  %v29 = vld [vmem:[%s0 + $0x10] sm:$0xff]
  %v30 = vld [vmem:[%s0 + $0x18] sm:$0xff]
  %vm31 = vcmask 64512
  %v33 = vsel %vm31, %v26, 0
  %35 = vmatprep.subr.mxu0 0.0
  %36 = vmatpush1.msra.mxu0 0.0
  %37 = vmatprep.subr.mxu0 0.0
  %38 = vmatpush1.msra.mxu0 0.0
  %39 = vmatprep.subr.mxu0 0.0
  %40 = vmatpush1.msra.mxu0 0.0
  %41 = vmatprep.subr.mxu0 0.0
  %42 = vmatpush1.msra.mxu0 0.0
  %43 = vmatprep.subr.mxu0 0.0
  %44 = vmatpush1.msra.mxu0 0.0
  %45 = vmatprep.subr.mxu0 0.0
  %46 = vmatpush1.msra.mxu0 0.0
  %47 = vmatprep.subr.mxu0 0.0
  %48 = vmatpush1.msra.mxu0 0.0
  %49 = vmatprep.subr.mxu0 0.0
  %50 = vmatpush1.msra.mxu0 0.0
  %51 = vmatprep.subr.mxu0 0.0
  %52 = vmatpush1.msra.mxu0 0.0
  %53 = vmatprep.subr.mxu0 0.0
  %54 = vmatpush1.msra.mxu0 0.0
  %55 = vmatprep.subr.mxu0 0.0
  %56 = vmatpush1.msra.mxu0 0.0
  %57 = vmatprep.subr.mxu0 0.0
  %58 = vmatpush1.msra.mxu0 0.0
  %59 = vmatprep.subr.mxu0 0.0
  %60 = vmatpush1.msra.mxu0 0.0
  %61 = vmatprep.subr.mxu0 0.0
  %62 = vmatpush1.msra.mxu0 0.0
  %63 = vmatprep.subr.mxu0 0.0
  %64 = vmatpush1.msra.mxu0 0.0
  %65 = vmatprep.subr.mxu0 %v28
  %66 = vmatpush1.msra.mxu0 %v27
  %67 = vmatprep.subr.mxu0 0.0
  %68 = vmatpush2.msra.mxu0 0.0
  %69 = vmatprep.subr.mxu0 0.0
  %70 = vmatpush2.msra.mxu0 0.0
  %71 = vmatprep.subr.mxu0 0.0
  %72 = vmatpush2.msra.mxu0 0.0
  %73 = vmatprep.subr.mxu0 0.0
  %74 = vmatpush2.msra.mxu0 0.0
  %75 = vmatprep.subr.mxu0 0.0
  %76 = vmatpush2.msra.mxu0 0.0
  %77 = vmatprep.subr.mxu0 0.0
  %78 = vmatpush2.msra.mxu0 0.0
  %79 = vmatprep.subr.mxu0 0.0
  %80 = vmatpush2.msra.mxu0 0.0
  %81 = vmatprep.subr.mxu0 0.0
  %82 = vmatpush2.msra.mxu0 0.0
  %83 = vmatprep.subr.mxu0 0.0
  %84 = vmatpush2.msra.mxu0 0.0
  %85 = vmatprep.subr.mxu0 0.0
  %86 = vmatpush2.msra.mxu0 0.0
  %87 = vmatprep.subr.mxu0 0.0
  %88 = vmatpush2.msra.mxu0 0.0
  %89 = vmatprep.subr.mxu0 0.0
  %90 = vmatpush2.msra.mxu0 0.0
  %91 = vmatprep.subr.mxu0 0.0
  %92 = vmatpush2.msra.mxu0 0.0
  %93 = vmatprep.subr.mxu0 0.0
  %94 = vmatpush2.msra.mxu0 0.0
  %95 = vmatprep.subr.mxu0 0.0
  %96 = vmatpush2.msra.mxu0 0.0
  %97 = vmatprep.subr.mxu0 0.0
  %98 = vmatpush2.msra.mxu0 0.0
  %99 = vmatprep.mubr.f32.mxu0 0.0
  %100 = vmatmul.mubr.f32.gmra.mxu0 %v33
  %v101 = vpop.f32.mrf.mxu0
  %v102 = vadd.f32 0.0, %v101
  %v103 = vpop.f32.mrf.mxu0
  %v104 = vadd.f32 0.0, %v103
  %105 = vdwg.mxu0
  %106 = vmatprep.subr.mxu0 0.0
  %107 = vmatpush1.msra.mxu0 0.0
  %108 = vmatprep.subr.mxu0 0.0
  %109 = vmatpush1.msra.mxu0 0.0
  %110 = vmatprep.subr.mxu0 0.0
  %111 = vmatpush1.msra.mxu0 0.0
  %112 = vmatprep.subr.mxu0 0.0
  %113 = vmatpush1.msra.mxu0 0.0
  %114 = vmatprep.subr.mxu0 0.0
  %115 = vmatpush1.msra.mxu0 0.0
  %116 = vmatprep.subr.mxu0 0.0
  %117 = vmatpush1.msra.mxu0 0.0
  %118 = vmatprep.subr.mxu0 0.0
  %119 = vmatpush1.msra.mxu0 0.0
  %120 = vmatprep.subr.mxu0 0.0
  %121 = vmatpush1.msra.mxu0 0.0
  %122 = vmatprep.subr.mxu0 0.0
  %123 = vmatpush1.msra.mxu0 0.0
  %124 = vmatprep.subr.mxu0 0.0
  %125 = vmatpush1.msra.mxu0 0.0
  %126 = vmatprep.subr.mxu0 0.0
  %127 = vmatpush1.msra.mxu0 0.0
  %128 = vmatprep.subr.mxu0 0.0
  %129 = vmatpush1.msra.mxu0 0.0
  %130 = vmatprep.subr.mxu0 0.0
  %131 = vmatpush1.msra.mxu0 0.0
  %132 = vmatprep.subr.mxu0 0.0
  %133 = vmatpush1.msra.mxu0 0.0
  %134 = vmatprep.subr.mxu0 0.0
  %135 = vmatpush1.msra.mxu0 0.0
  %136 = vmatprep.subr.mxu0 %v30
  %137 = vmatpush1.msra.mxu0 %v29
  %138 = vmatprep.subr.mxu0 0.0
  %139 = vmatpush2.msra.mxu0 0.0
  %140 = vmatprep.subr.mxu0 0.0
  %141 = vmatpush2.msra.mxu0 0.0
  %142 = vmatprep.subr.mxu0 0.0
  %143 = vmatpush2.msra.mxu0 0.0
  %144 = vmatprep.subr.mxu0 0.0
  %145 = vmatpush2.msra.mxu0 0.0
  %146 = vmatprep.subr.mxu0 0.0
  %147 = vmatpush2.msra.mxu0 0.0
  %148 = vmatprep.subr.mxu0 0.0
  %149 = vmatpush2.msra.mxu0 0.0
  %150 = vmatprep.subr.mxu0 0.0
  %151 = vmatpush2.msra.mxu0 0.0
  %152 = vmatprep.subr.mxu0 0.0
  %153 = vmatpush2.msra.mxu0 0.0
  %154 = vmatprep.subr.mxu0 0.0
  %155 = vmatpush2.msra.mxu0 0.0
  %156 = vmatprep.subr.mxu0 0.0
  %157 = vmatpush2.msra.mxu0 0.0
  %158 = vmatprep.subr.mxu0 0.0
  %159 = vmatpush2.msra.mxu0 0.0
  %160 = vmatprep.subr.mxu0 0.0
  %161 = vmatpush2.msra.mxu0 0.0
  %162 = vmatprep.subr.mxu0 0.0
  %163 = vmatpush2.msra.mxu0 0.0
  %164 = vmatprep.subr.mxu0 0.0
  %165 = vmatpush2.msra.mxu0 0.0
  %166 = vmatprep.subr.mxu0 0.0
  %167 = vmatpush2.msra.mxu0 0.0
  %168 = vmatprep.subr.mxu0 0.0
  %169 = vmatpush2.msra.mxu0 0.0
  %170 = vmatprep.mubr.f32.mxu0 0.0
  %171 = vmatmul.mubr.f32.gmra.mxu0 %v33
  %v172 = vpop.f32.mrf.mxu0
  %v173 = vadd.f32 0.0, %v172
  %v174 = vpop.f32.mrf.mxu0
  %v175 = vadd.f32 0.0, %v174
  %176 = vdwg.mxu0
  %v177 = vld [vmem:[%s2] sm:$0xff]
  %v178 = vld [vmem:[%s3] sm:$0xff]
  %v179 = vadd.f32 %v102, %v104
  %v180 = vadd.f32 %v179, %v173
  %v181 = vadd.f32 %v180, %v175
  %182 = vadd.xlane.f32.xlu0 %v181
  %v183 = vpop.xlane.xlu0 %182
  %v184 = vrcp.pop 512.0
  %v185 = vmul.f32 %v183, %v184
  %v186 = vsub.f32 %v102, %v185
  %v187 = vsub.f32 %v104, %v185
  %v188 = vsub.f32 %v173, %v185
  %v189 = vsub.f32 %v175, %v185
  %v190 = vmul.f32 %v186, %v186
  %v191 = vmul.f32 %v187, %v187
  %v192 = vmul.f32 %v188, %v188
  %v193 = vmul.f32 %v189, %v189
  %v194 = vadd.f32 %v190, %v191
  %v195 = vadd.f32 %v194, %v192
  %v196 = vadd.f32 %v195, %v193
  %197 = vadd.xlane.f32.xlu0 %v196
  %v198 = vpop.xlane.xlu0 %197
  %v199 = vmul.f32 %v198, %v184
  %v200 = vadd.f32 %v199, 1e-05
  %v201 = vrsqrt.pop %v200
  %v202 = vmul.f32 %v186, %v201
  %v203 = vmul.f32 %v187, %v201
  %v204 = vmul.f32 %v188, %v201
  %v205 = vmul.f32 %v189, %v201
  %207 = vset.pattern.permute.xlu0 0
  %208 = vperm.xlu0 %207, %v177
  %v209 = vpop.permute.xlu0 %208
  %v211 = vmul.f32 %v202, %v209
  %v212 = vmul.f32 %v203, %v209
  %v213 = vmul.f32 %v204, %v209
  %v214 = vmul.f32 %v205, %v209
  %216 = vset.pattern.permute.xlu0 0
  %217 = vperm.xlu0 %216, %v178
  %v218 = vpop.permute.xlu0 %217
  %v220 = vadd.f32 %v211, %v218
  %v221 = vadd.f32 %v212, %v218
  %v222 = vadd.f32 %v213, %v218
  %v223 = vadd.f32 %v214, %v218
  %v224 = vmax.f32 %v220, 0.0
  %v225 = vmax.f32 %v221, 0.0
  %v226 = vmax.f32 %v222, 0.0
  %v227 = vmax.f32 %v223, 0.0
  %v228 = vld [vmem:[%s4] sm:$0xff]
  %v230 = vsel %vm31, %v228, 0
  %232 = vmatprep.subr.mxu0 0.0
  %233 = vmatpush1.msra.mxu0 0.0
  %234 = vmatprep.subr.mxu0 0.0
  %235 = vmatpush1.msra.mxu0 0.0
  %236 = vmatprep.subr.mxu0 0.0
  %237 = vmatpush1.msra.mxu0 0.0
  %238 = vmatprep.subr.mxu0 0.0
  %239 = vmatpush1.msra.mxu0 0.0
  %240 = vmatprep.subr.mxu0 0.0
  %241 = vmatpush1.msra.mxu0 0.0
  %242 = vmatprep.subr.mxu0 0.0
  %243 = vmatpush1.msra.mxu0 0.0
  %244 = vmatprep.subr.mxu0 0.0
  %245 = vmatpush1.msra.mxu0 0.0
  %246 = vmatprep.subr.mxu0 0.0
  %247 = vmatpush1.msra.mxu0 0.0
  %248 = vmatprep.subr.mxu0 0.0
  %249 = vmatpush1.msra.mxu0 0.0
  %250 = vmatprep.subr.mxu0 0.0
  %251 = vmatpush1.msra.mxu0 0.0
  %252 = vmatprep.subr.mxu0 0.0
  %253 = vmatpush1.msra.mxu0 0.0
  %254 = vmatprep.subr.mxu0 0.0
  %255 = vmatpush1.msra.mxu0 0.0
  %256 = vmatprep.subr.mxu0 0.0
  %257 = vmatpush1.msra.mxu0 0.0
  %258 = vmatprep.subr.mxu0 0.0
  %259 = vmatpush1.msra.mxu0 0.0
  %260 = vmatprep.subr.mxu0 0.0
  %261 = vmatpush1.msra.mxu0 0.0
  %262 = vmatprep.subr.mxu0 %v225
  %263 = vmatpush1.msra.mxu0 %v224
  %264 = vmatprep.subr.mxu0 0.0
  %265 = vmatpush2.msra.mxu0 0.0
  %266 = vmatprep.subr.mxu0 0.0
  %267 = vmatpush2.msra.mxu0 0.0
  %268 = vmatprep.subr.mxu0 0.0
  %269 = vmatpush2.msra.mxu0 0.0
  %270 = vmatprep.subr.mxu0 0.0
  %271 = vmatpush2.msra.mxu0 0.0
  %272 = vmatprep.subr.mxu0 0.0
  %273 = vmatpush2.msra.mxu0 0.0
  %274 = vmatprep.subr.mxu0 0.0
  %275 = vmatpush2.msra.mxu0 0.0
  %276 = vmatprep.subr.mxu0 0.0
  %277 = vmatpush2.msra.mxu0 0.0
  %278 = vmatprep.subr.mxu0 0.0
  %279 = vmatpush2.msra.mxu0 0.0
  %280 = vmatprep.subr.mxu0 0.0
  %281 = vmatpush2.msra.mxu0 0.0
  %282 = vmatprep.subr.mxu0 0.0
  %283 = vmatpush2.msra.mxu0 0.0
  %284 = vmatprep.subr.mxu0 0.0
  %285 = vmatpush2.msra.mxu0 0.0
  %286 = vmatprep.subr.mxu0 0.0
  %287 = vmatpush2.msra.mxu0 0.0
  %288 = vmatprep.subr.mxu0 0.0
  %289 = vmatpush2.msra.mxu0 0.0
  %290 = vmatprep.subr.mxu0 0.0
  %291 = vmatpush2.msra.mxu0 0.0
  %292 = vmatprep.subr.mxu0 0.0
  %293 = vmatpush2.msra.mxu0 0.0
  %294 = vmatprep.subr.mxu0 0.0
  %295 = vmatpush2.msra.mxu0 0.0
  %296 = vmatprep.mubr.f32.mxu0 0.0
  %297 = vmatmul.mubr.f32.gmra.mxu0 %v230
  %v298 = vpop.f32.mrf.mxu0
  %v299 = vadd.f32 0.0, %v298
  %v300 = vpop.f32.mrf.mxu0
  %v301 = vadd.f32 0.0, %v300
  %302 = vdwg.mxu0
  %303 = vmatprep.subr.mxu0 0.0
  %304 = vmatpush1.msra.mxu0 0.0
  %305 = vmatprep.subr.mxu0 0.0
  %306 = vmatpush1.msra.mxu0 0.0
  %307 = vmatprep.subr.mxu0 0.0
  %308 = vmatpush1.msra.mxu0 0.0
  %309 = vmatprep.subr.mxu0 0.0
  %310 = vmatpush1.msra.mxu0 0.0
  %311 = vmatprep.subr.mxu0 0.0
  %312 = vmatpush1.msra.mxu0 0.0
  %313 = vmatprep.subr.mxu0 0.0
  %314 = vmatpush1.msra.mxu0 0.0
  %315 = vmatprep.subr.mxu0 0.0
  %316 = vmatpush1.msra.mxu0 0.0
  %317 = vmatprep.subr.mxu0 0.0
  %318 = vmatpush1.msra.mxu0 0.0
  %319 = vmatprep.subr.mxu0 0.0
  %320 = vmatpush1.msra.mxu0 0.0
  %321 = vmatprep.subr.mxu0 0.0
  %322 = vmatpush1.msra.mxu0 0.0
  %323 = vmatprep.subr.mxu0 0.0
  %324 = vmatpush1.msra.mxu0 0.0
  %325 = vmatprep.subr.mxu0 0.0
  %326 = vmatpush1.msra.mxu0 0.0
  %327 = vmatprep.subr.mxu0 0.0
  %328 = vmatpush1.msra.mxu0 0.0
  %329 = vmatprep.subr.mxu0 0.0
  %330 = vmatpush1.msra.mxu0 0.0
  %331 = vmatprep.subr.mxu0 0.0
  %332 = vmatpush1.msra.mxu0 0.0
  %333 = vmatprep.subr.mxu0 %v227
  %334 = vmatpush1.msra.mxu0 %v226
  %335 = vmatprep.subr.mxu0 0.0
  %336 = vmatpush2.msra.mxu0 0.0
  %337 = vmatprep.subr.mxu0 0.0
  %338 = vmatpush2.msra.mxu0 0.0
  %339 = vmatprep.subr.mxu0 0.0
  %340 = vmatpush2.msra.mxu0 0.0
  %341 = vmatprep.subr.mxu0 0.0
  %342 = vmatpush2.msra.mxu0 0.0
  %343 = vmatprep.subr.mxu0 0.0
  %344 = vmatpush2.msra.mxu0 0.0
  %345 = vmatprep.subr.mxu0 0.0
  %346 = vmatpush2.msra.mxu0 0.0
  %347 = vmatprep.subr.mxu0 0.0
  %348 = vmatpush2.msra.mxu0 0.0
  %349 = vmatprep.subr.mxu0 0.0
  %350 = vmatpush2.msra.mxu0 0.0
  %351 = vmatprep.subr.mxu0 0.0
  %352 = vmatpush2.msra.mxu0 0.0
  %353 = vmatprep.subr.mxu0 0.0
  %354 = vmatpush2.msra.mxu0 0.0
  %355 = vmatprep.subr.mxu0 0.0
  %356 = vmatpush2.msra.mxu0 0.0
  %357 = vmatprep.subr.mxu0 0.0
  %358 = vmatpush2.msra.mxu0 0.0
  %359 = vmatprep.subr.mxu0 0.0
  %360 = vmatpush2.msra.mxu0 0.0
  %361 = vmatprep.subr.mxu0 0.0
  %362 = vmatpush2.msra.mxu0 0.0
  %363 = vmatprep.subr.mxu0 0.0
  %364 = vmatpush2.msra.mxu0 0.0
  %365 = vmatprep.subr.mxu0 0.0
  %366 = vmatpush2.msra.mxu0 0.0
  %367 = vmatprep.mubr.f32.mxu0 0.0
  %368 = vmatmul.mubr.f32.gmra.mxu0 %v230
  %v369 = vpop.f32.mrf.mxu0
  %v370 = vadd.f32 0.0, %v369
  %v371 = vpop.f32.mrf.mxu0
  %v372 = vadd.f32 0.0, %v371
  %373 = vdwg.mxu0
  %v374 = vld [vmem:[%s5] sm:$0xff]
  %v375 = vld [vmem:[%s6] sm:$0xff]
  %v376 = vadd.f32 %v299, %v301
  %v377 = vadd.f32 %v376, %v370
  %v378 = vadd.f32 %v377, %v372
  %379 = vadd.xlane.f32.xlu0 %v378
  %v380 = vpop.xlane.xlu0 %379
  %v381 = vmul.f32 %v380, %v184
  %v382 = vsub.f32 %v299, %v381
  %v383 = vsub.f32 %v301, %v381
  %v384 = vsub.f32 %v370, %v381
  %v385 = vsub.f32 %v372, %v381
  %v386 = vmul.f32 %v382, %v382
  %v387 = vmul.f32 %v383, %v383
  %v388 = vmul.f32 %v384, %v384
  %v389 = vmul.f32 %v385, %v385
  %v390 = vadd.f32 %v386, %v387
  %v391 = vadd.f32 %v390, %v388
  %v392 = vadd.f32 %v391, %v389
  %393 = vadd.xlane.f32.xlu0 %v392
  %v394 = vpop.xlane.xlu0 %393
  %v395 = vmul.f32 %v394, %v184
  %v396 = vadd.f32 %v395, 1e-05
  %v397 = vrsqrt.pop %v396
  %v398 = vmul.f32 %v382, %v397
  %v399 = vmul.f32 %v383, %v397
  %v400 = vmul.f32 %v384, %v397
  %v401 = vmul.f32 %v385, %v397
  %403 = vset.pattern.permute.xlu0 0
  %404 = vperm.xlu0 %403, %v374
  %v405 = vpop.permute.xlu0 %404
  %v407 = vmul.f32 %v398, %v405
  %v408 = vmul.f32 %v399, %v405
  %v409 = vmul.f32 %v400, %v405
  %v410 = vmul.f32 %v401, %v405
  %412 = vset.pattern.permute.xlu0 0
  %413 = vperm.xlu0 %412, %v375
  %v414 = vpop.permute.xlu0 %413
  %v416 = vadd.f32 %v407, %v414
  %v417 = vadd.f32 %v408, %v414
  %v418 = vadd.f32 %v409, %v414
  %v419 = vadd.f32 %v410, %v414
  %v420 = vmax.f32 %v416, 0.0
  %v421 = vmax.f32 %v417, 0.0
  %v422 = vmax.f32 %v418, 0.0
  %v423 = vmax.f32 %v419, 0.0
  %424 = vst [vmem:[%s7] sm:$0xff] %v420
  %425 = vst [vmem:[%s7 + $0x8] sm:$0xff] %v421
  %426 = vst [vmem:[%s7 + $0x10] sm:$0xff] %v422
  %427 = vst [vmem:[%s7 + $0x18] sm:$0xff] %v423
  // Predicated region
  $region30: #{_fused_branch_nchw.1} parent=0 // pred_check
    _
  $region31: #{_fused_branch_nchw.1} parent=0 // pred_check_branch
    %429 = sbr.rel (0) target = $region33
  $region32: #{_fused_branch_nchw.1} parent=0 // pred_region
    _
  $region33: #{_fused_branch_nchw.1} parent=0 // pred_fallthru
    _
  // Predicated region
  $region34: #{_fused_branch_nchw.1} parent=0 // pred_check
    _
  $region35: #{_fused_branch_nchw.1} parent=0 // pred_check_branch
    %431 = sbr.rel (0) target = $region37
  $region36: #{_fused_branch_nchw.1} parent=0 // pred_region
    _
  $region37: #{_fused_branch_nchw.1} parent=0 // pred_fallthru
    _

</llo_original>
